<compile_context>
chip_gen: v7x
topology: tpu7x:2x2x1
jax: 0.10.0
libtpu: 0.0.40
codegen_flags: <defaults>
</compile_context>

<pallas_src>
import math
from functools import partial

import jax
import jax.numpy as jnp
from jax import lax
from jax.experimental import pallas as pl
from jax.experimental.pallas import tpu as pltpu


def _round_up(x, m):
    return ((x + m - 1) // m) * m


def _gemm_bias_kernel(p_ref, w_ref, b_ref, o_ref):
    # One (TM, K_pad) x (K_pad, N) MXU GEMM per grid step, f32 accumulate, +bias.
    acc = jnp.dot(p_ref[...], w_ref[...], preferred_element_type=jnp.float32)
    o_ref[...] = (acc + b_ref[...]).astype(o_ref.dtype)


def _im2col(x, kernel, stride, padding):
    """x: (B, C, H, W) -> patches (B*Ho*Wo, C*kh*kw), plus (Ho, Wo).

    The flattened patch axis is ordered (c, ki, kj), matching
    weight.reshape(dim_out, C*kh*kw) for an OIHW conv weight.  Runs in the
    dtype of x (bf16 on the hot path).
    """
    B, C, H, W = x.shape
    kh, kw = kernel
    sh, sw = stride
    ph, pw = padding
    Ho = (H + 2 * ph - kh) // sh + 1
    Wo = (W + 2 * pw - kw) // sw + 1
    cols = lax.conv_general_dilated_patches(
        x,
        filter_shape=(kh, kw),
        window_strides=(sh, sw),
        padding=[(ph, ph), (pw, pw)],
        dimension_numbers=("NCHW", "OIHW", "NCHW"),
    )                                                    # (B, C*kh*kw, Ho, Wo)
    patches = cols.transpose(0, 2, 3, 1).reshape(B * Ho * Wo, C * kh * kw)
    return patches, Ho, Wo


def _choose_tile_m(M, tile_m):
    """Pick an M tile (multiple of 8) and the padded M.

    Prefers a tile that (a) divides M exactly, so M_pad == M and the post-call
    un-padding slice disappears, and (b) yields grid_m >= 2 so the "parallel"
    axis can be sharded across both TensorCores on v7x.  Falls back to padding
    M up to a multiple of the tile when no suitable divisor exists.
    """
    tile_m = max(8, (tile_m // 8) * 8)
    cap = min(tile_m, M)
    if M >= 16:                                   # leave room for >= 2 tiles
        cap = max(8, min(cap, (M // 2 // 8) * 8))
    cap = max(8, (cap // 8) * 8)
    for cand in range(cap, 7, -8):                # largest 8-multiple divisor
        if M % cand == 0:
            return cand, M
    tm = min(tile_m, _round_up(M, 8))
    return tm, _round_up(M, tm)


@partial(jax.jit,
         static_argnames=("kernel", "stride", "padding", "tile_m", "out_dtype"))
def _patch_embed_tokens(x, weight, bias, *, kernel, stride, padding, tile_m,
                        out_dtype):
    B, C, H, W = x.shape
    dim_out = weight.shape[0]
    kh, kw = kernel
    out_dtype = jnp.dtype(x.dtype if out_dtype is None else out_dtype)

    # bf16 patch extraction (single fused XLA op + layout copy).
    patches, Ho, Wo = _im2col(x.astype(jnp.bfloat16), kernel, stride, padding)
    M, K = patches.shape
    N = dim_out

    K_pad = _round_up(K, 128)

    # Cap TM so the double-buffered patches + output tiles (plus the resident
    # weight/bias) stay well under the 32 MiB scoped-VMEM default — v7x only
    # has 64 MiB of VMEM per TensorCore, so do not tune against 128 MiB.
    out_item = out_dtype.itemsize
    fixed = 2 * (K_pad * N * 2 + _round_up(N, 128) * 4)          # weight + bias
    per_row = 2 * (K_pad * 2 + _round_up(N, 128) * out_item)     # patches + out
    budget = 24 * 1024 * 1024
    tm_cap = max(8, ((budget - fixed) // per_row) // 8 * 8)
    TM, M_pad = _choose_tile_m(M, min(tile_m, tm_cap))
    grid_m = M_pad // TM

    # Single fused zero-pad: K -> K_pad lanes; M -> M_pad only when TM does not
    # divide M (rare — _choose_tile_m prefers exact divisors).
    p_bf16 = jnp.pad(patches, ((0, M_pad - M), (0, K_pad - K)))

    w_mat = weight.reshape(dim_out, C * kh * kw).T.astype(jnp.bfloat16)  # (K, N)
    w_bf16 = jnp.pad(w_mat, ((0, K_pad - K), (0, 0)))                    # (K_pad, N)
    b_row = bias.reshape(1, N).astype(jnp.float32)

    cost = pl.CostEstimate(
        flops=2 * M_pad * K_pad * N,
        transcendentals=0,
        bytes_accessed=(M_pad * K_pad * 2 + K_pad * N * 2
                        + M_pad * N * out_item + N * 4),
    )

    out = pl.pallas_call(
        _gemm_bias_kernel,
        out_shape=jax.ShapeDtypeStruct((M_pad, N), out_dtype),
        grid=(grid_m,),
        in_specs=[
            pl.BlockSpec((TM, K_pad), lambda i: (i, 0)),   # streamed M tiles
            # Constant index_map -> fetched once, stays VMEM-resident across
            # the grid (no per-step weight/bias DMA).
            pl.BlockSpec((K_pad, N), lambda i: (0, 0)),
            pl.BlockSpec((1, N), lambda i: (0, 0)),
        ],
        out_specs=pl.BlockSpec((TM, N), lambda i: (i, 0)),
        compiler_params=pltpu.CompilerParams(
            dimension_semantics=("parallel",),             # independent M tiles
            vmem_limit_bytes=32 * 1024 * 1024,             # safe on v5e/v6e/v7x
        ),
        cost_estimate=cost,
    )(p_bf16, w_bf16, b_row)

    if M_pad != M:
        out = out[:M]
    return out.reshape(B, Ho * Wo, dim_out)


def patch_embed_forward(x, weight, bias, kernel=(7, 7), stride=(4, 4),
                        padding=(3, 3), tile_m=2048, out_dtype=None):
    """Pallas implementation of PatchEmbed.forward.

    x:      (B, C, H, W)         float32, NCHW (PyTorch conv layout)
    weight: (dim_out, C, kh, kw) float32
    bias:   (dim_out,)           float32
    Returns (tokens, conv_shape): tokens (B, Ho*Wo, dim_out),
    conv_shape == (B, dim_out, Ho, Wo) (the pre-flatten conv output shape).
    """
    B, C, H, W = x.shape
    dim_out = weight.shape[0]
    kh, kw = kernel
    sh, sw = stride
    ph, pw = padding
    Ho = (H + 2 * ph - kh) // sh + 1
    Wo = (W + 2 * pw - kw) // sw + 1
    tokens = _patch_embed_tokens(x, weight, bias, kernel=kernel, stride=stride,
                                 padding=padding, tile_m=tile_m,
                                 out_dtype=out_dtype)
    return tokens, (B, dim_out, Ho, Wo)


def init_patch_embed_params(key, dim_in, dim_out, kernel):
    """Deterministic init mimicking nn.Conv2d defaults (kaiming-uniform-ish)."""
    kh, kw = kernel
    fan_in = dim_in * kh * kw
    bound_w = math.sqrt(6.0 / fan_in)       # kaiming_uniform(a=sqrt(5)) bound
    bound_b = 1.0 / math.sqrt(fan_in)
    kw_key, kb_key = jax.random.split(key)
    weight = jax.random.uniform(kw_key, (dim_out, dim_in, kh, kw),
                                jnp.float32, -bound_w, bound_w)
    bias = jax.random.uniform(kb_key, (dim_out,), jnp.float32, -bound_b, bound_b)
    return weight, bias


if __name__ == "__main__":
    # Small shapes consistent with the module: B=2, C=4, H=W=16, dim_out=32.
    B, C, H, W = 2, 4, 16, 16
    dim_in, dim_out = C, 32
    kernel, stride, padding = (7, 7), (4, 4), (3, 3)

    key = jax.random.PRNGKey(0)
    kx, kp = jax.random.split(key)
    x = jax.random.normal(kx, (B, C, H, W), dtype=jnp.float32)
    weight, bias = init_patch_embed_params(kp, dim_in, dim_out, kernel)

    tokens, conv_shape = patch_embed_forward(x, weight, bias, kernel, stride,
                                             padding)
    tokens = jax.block_until_ready(tokens)

    # Reference check with XLA's conv (not part of the kernel path).
    ref_conv = lax.conv_general_dilated(
        x, weight, window_strides=stride,
        padding=[(padding[0], padding[0]), (padding[1], padding[1])],
        dimension_numbers=("NCHW", "OIHW", "NCHW"),
    ) + bias.reshape(1, dim_out, 1, 1)
    ref_tokens = ref_conv.reshape(B, dim_out, -1).transpose(0, 2, 1)

    assert tokens.shape == (B, (H // 4) * (W // 4), dim_out), tokens.shape
    assert conv_shape == (B, dim_out, H // 4, W // 4), conv_shape
    # bf16 MXU inputs with f32 accumulation -> tolerance loosened accordingly.
    assert jnp.allclose(tokens, ref_tokens, atol=5e-2, rtol=5e-2), (
        float(jnp.max(jnp.abs(tokens - ref_tokens))))

    print("KERNEL_OK")
</pallas_src>

<mosaic_0001>
module attributes {stable_mosaic.version = 11 : i64} {
  func.func @_gemm_bias_kernel(%arg0: i32, %arg1: memref<16x256xbf16, #tpu.memory_space<vmem>>, %arg2: memref<256x32xbf16, #tpu.memory_space<vmem>>, %arg3: memref<1x32xf32, #tpu.memory_space<vmem>>, %arg4: memref<16x32xf32, #tpu.memory_space<vmem>>) attributes {dimension_semantics = [#tpu.dimension_semantics<parallel>], iteration_bounds = array<i64: 2>, scalar_prefetch = 0 : i64, scratch_operands = 0 : i64, tpu.core_type = #tpu.core_type<tc>, window_params = [{transform_indices = @transform_0, window_bounds = array<i64: 16, 256>}, {pipeline_mode = #tpu.pipeline_mode<synchronous>, transform_indices = @transform_1, window_bounds = array<i64: 256, 32>}, {pipeline_mode = #tpu.pipeline_mode<synchronous>, transform_indices = @transform_2, window_bounds = array<i64: 1, 32>}, {transform_indices = @transform_3, window_bounds = array<i64: 16, 32>}]} {
    %c0 = arith.constant 0 : index
    %c0_0 = arith.constant 0 : index
    %0 = vector.load %arg1[%c0, %c0_0] : memref<16x256xbf16, #tpu.memory_space<vmem>>, vector<16x256xbf16>
    %c0_1 = arith.constant 0 : index
    %c0_2 = arith.constant 0 : index
    %1 = vector.load %arg2[%c0_1, %c0_2] : memref<256x32xbf16, #tpu.memory_space<vmem>>, vector<256x32xbf16>
    %cst = arith.constant dense<0.000000e+00> : vector<16x32xf32>
    %2 = tpu.matmul %0, %1, %cst {dimension_numbers = #tpu.dot_dimension_numbers<[1], [0], [0], [1], [0, 0, 1, 1], [], []>} : vector<16x256xbf16>, vector<256x32xbf16>, vector<16x32xf32> -> vector<16x32xf32>
    %c0_3 = arith.constant 0 : index
    %c0_4 = arith.constant 0 : index
    %3 = vector.load %arg3[%c0_3, %c0_4] : memref<1x32xf32, #tpu.memory_space<vmem>>, vector<1x32xf32>
    %4 = vector.broadcast %3 : vector<1x32xf32> to vector<16x32xf32>
    %5 = arith.addf %2, %4 : vector<16x32xf32>
    %c0_5 = arith.constant 0 : index
    %c0_6 = arith.constant 0 : index
    %6 = vector.load %arg4[%c0_5, %c0_6] : memref<16x32xf32, #tpu.memory_space<vmem>>, vector<16x32xf32>
    tpu.vector_store %arg4[%c0_5, %c0_6], %5 {strides = array<i32>} : memref<16x32xf32, #tpu.memory_space<vmem>>, vector<16x32xf32>,
    return
  }
  func.func @transform_0(%arg0: i32) -> (i32, i32) {
    %c0_i32 = arith.constant 0 : i32
    %c0_i32_0 = arith.constant 0 : i32
    return %arg0, %c0_i32 : i32, i32
  }
  func.func @transform_1(%arg0: i32) -> (i32, i32) {
    %c0_i32 = arith.constant 0 : i32
    %c0_i32_0 = arith.constant 0 : i32
    %c0_i32_1 = arith.constant 0 : i32
    return %c0_i32, %c0_i32_0 : i32, i32
  }
  func.func @transform_2(%arg0: i32) -> (i32, i32) {
    %c0_i32 = arith.constant 0 : i32
    %c0_i32_0 = arith.constant 0 : i32
    %c0_i32_1 = arith.constant 0 : i32
    return %c0_i32, %c0_i32_0 : i32, i32
  }
  func.func @transform_3(%arg0: i32) -> (i32, i32) {
    %c0_i32 = arith.constant 0 : i32
    %c0_i32_0 = arith.constant 0 : i32
    return %arg0, %c0_i32 : i32, i32
  }
}

</mosaic_0001>

<llo_original>
// kernel: _patch_embed_tokens.1
$region0: #{_patch_embed_tokens.1}
  #allocation0 [shape = 'u32[]', space=smem, size = 0x4, offset = 0x4, fixed_abs, tag = 'smem constant byte address 0x4 - core index']
  #allocation1 [shape = 'u32[144,128]{1,0:T(1,128)}', space=vmem, size = 0x12000, scoped, tag = 'internal scratch']
  %s0 = inlined_call_operand.vmem [shape: bf16[32,256], index: 0, kind: input, shape index: {}]
  %s1 = inlined_call_operand.vmem [shape: bf16[256,32], index: 1, kind: input, shape index: {}]
  %s2 = inlined_call_operand.vmem [shape: f32[1,32], index: 2, kind: input, shape index: {}]
  %s3 = inlined_call_operand.hbm [shape: f32[32,32], index: 3, kind: output, shape index: {}]
  %s4 = sld [smem:[#allocation0]]
  $region45: #{_patch_embed_tokens.1} parent=0
    _
  %s6 = ssub.s32 1, %s4
  %s7 = scalar_select 0, %s6, %s4
  $region1: #{_patch_embed_tokens.1} parent=0
    #allocation2 [shape = 'u8[16384]{0}', space=vmem, size = 0x4000, scoped, tag = 'output window, operand 0']
    #allocation3 [shape = 's32[2]{0}', space=sflag, size = 0x8, scoped, tag = 'scoped memory for _patch_embed_tokens.1']
    %8 = vsyncpa [#allocation3], 0
    %s9 = scalar_lea.sflag [#allocation3], 1
    %10 = vsyncpa %s9, 0
    loop: start=0, step=1, limit=4
    $region2: #{_patch_embed_tokens.1} parent=1 // loop_pre_header
      _
    $region3: #{_patch_embed_tokens.1} parent=1 // loop_header
      %s12 = sphi 0, %s16
      %p13 = scmp.ge.s32.totalorder %s12, 4
      %s22 = sphi 0, %s24
      %s25 = sphi 0, %s22
      %s26 = sphi 0, %s25
      %s42 = sphi 0, %s26
      %s46 = sphi 0, %s46
      %s48 = sphi 0, %s46
      %s49 = sphi 0, %s48
      %s63 = sphi 0, %s49
      %s67 = sphi 0, %s67
      %s69 = sphi 0, %s67
      %s70 = sphi 0, %s69
      %s84 = sphi 0, %s70
      %s90 = sphi 0, %s92
      %s93 = sphi 0, %s90
      %s94 = sphi 0, %s93
      %s110 = sphi 0, %s94
    $region4: #{_patch_embed_tokens.1} parent=1 // loop_header_branch
      %15 = sbr.rel (%p13) target = $region8
    $region5: #{_patch_embed_tokens.1} parent=1 // loop_body
      %s17 = ssub.s32 %s12, 1
      %s18 = ssub.s32 %s12, 2
      %s19 = sadd.s32 %s12, 1
      %s20 = ssub.s32 %s12, %s19
      %p21 = scmp.eq.s32.totalorder %s20, 0
      %s23 = sadd.s32 %s22, 1
      %s24 = scalar_select %p21, %s22, %s23
      %p27 = pneg %p21
      %p28 = scmp.eq.s32.totalorder %s12, 1
      %p29 = por %p27, %p28
      %p30 = scmp.ne.s32.totalorder %s22, %s25
      %p31 = scmp.eq.s32.totalorder %s12, 0
      %p32 = por %p30, %p31
      %p33 = scmp.ne.s32.totalorder %s22, %s25
      %p34 = scmp.eq.s32.totalorder %s17, 1
      %p35 = por %p33, %p34
      %p36 = scmp.ne.s32.totalorder %s25, %s26
      %p37 = scmp.eq.s32.totalorder %s17, 0
      %p38 = por %p36, %p37
      %p39 = scmp.ne.s32.totalorder %s25, %s26
      %p40 = scmp.eq.s32.totalorder %s18, 1
      %p41 = por %p39, %p40
      %p43 = scmp.ne.s32.totalorder %s26, %s42
      %p44 = scmp.eq.s32.totalorder %s18, 0
      %p45 = por %p43, %p44
      %s47 = sadd.s32 %s46, 1
      %p50 = scmp.eq.s32.totalorder %s12, 1
      %p51 = scmp.ne.s32.totalorder %s46, %s48
      %p52 = scmp.eq.s32.totalorder %s12, 0
      %p53 = por %p51, %p52
      %p54 = scmp.ne.s32.totalorder %s46, %s48
      %p55 = scmp.eq.s32.totalorder %s17, 1
      %p56 = por %p54, %p55
      %p57 = scmp.ne.s32.totalorder %s48, %s49
      %p58 = scmp.eq.s32.totalorder %s17, 0
      %p59 = por %p57, %p58
      %p60 = scmp.ne.s32.totalorder %s48, %s49
      %p61 = scmp.eq.s32.totalorder %s18, 1
      %p62 = por %p60, %p61
      %p64 = scmp.ne.s32.totalorder %s49, %s63
      %p65 = scmp.eq.s32.totalorder %s18, 0
      %p66 = por %p64, %p65
      %s68 = sadd.s32 %s67, 1
      %p71 = scmp.eq.s32.totalorder %s12, 1
      %p72 = scmp.ne.s32.totalorder %s67, %s69
      %p73 = scmp.eq.s32.totalorder %s12, 0
      %p74 = por %p72, %p73
      %p75 = scmp.ne.s32.totalorder %s67, %s69
      %p76 = scmp.eq.s32.totalorder %s17, 1
      %p77 = por %p75, %p76
      %p78 = scmp.ne.s32.totalorder %s69, %s70
      %p79 = scmp.eq.s32.totalorder %s17, 0
      %p80 = por %p78, %p79
      %p81 = scmp.ne.s32.totalorder %s69, %s70
      %p82 = scmp.eq.s32.totalorder %s18, 1
      %p83 = por %p81, %p82
      %p85 = scmp.ne.s32.totalorder %s70, %s84
      %p86 = scmp.eq.s32.totalorder %s18, 0
      %p87 = por %p85, %p86
      %s88 = ssub.s32 %s12, %s19
      %p89 = scmp.eq.s32.totalorder %s88, 0
      %s91 = sadd.s32 %s90, 1
      %s92 = scalar_select %p89, %s90, %s91
      %p95 = pneg %p89
      %p96 = scmp.eq.s32.totalorder %s12, 1
      %p97 = por %p95, %p96
      %p98 = scmp.ne.s32.totalorder %s90, %s93
      %p99 = scmp.eq.s32.totalorder %s12, 0
      %p100 = por %p98, %p99
      %p101 = scmp.ne.s32.totalorder %s90, %s93
      %p102 = scmp.eq.s32.totalorder %s17, 1
      %p103 = por %p101, %p102
      %p104 = scmp.ne.s32.totalorder %s93, %s94
      %p105 = scmp.eq.s32.totalorder %s17, 0
      %p106 = por %p104, %p105
      %p107 = scmp.ne.s32.totalorder %s93, %s94
      %p108 = scmp.eq.s32.totalorder %s18, 1
      %p109 = por %p107, %p108
      %p111 = scmp.ne.s32.totalorder %s94, %s110
      %p112 = scmp.eq.s32.totalorder %s18, 0
      %p113 = por %p111, %p112
      %p114 = scmp.le.s32.totalorder 1, %s12
      %p115 = scmp.lt.s32.totalorder %s12, 3
      %p116 = pnand %p114, %p115
      %p117 = pneg %p116
      // Predicated region
      $region9: #{_patch_embed_tokens.1} parent=5 // pred_check
        _
      $region10: #{_patch_embed_tokens.1} parent=5 // pred_check_branch
        %119 = sbr.rel (%p116) target = $region12
      $region11: #{_patch_embed_tokens.1} parent=5 // pred_region
        %s120 = ssub.s32 %s12, 1
        // Predicated region
        $region13: #{_patch_embed_tokens.1} parent=11 // pred_check
          %p121 = pneg %p59
        $region14: #{_patch_embed_tokens.1} parent=11 // pred_check_branch
          %123 = sbr.rel (%p121) target = $region16
        $region15: #{_patch_embed_tokens.1} parent=11 // pred_region
          _
        $region16: #{_patch_embed_tokens.1} parent=11 // pred_fallthru
          _
        // Predicated region
        $region17: #{_patch_embed_tokens.1} parent=11 // pred_check
          %p124 = pneg %p80
        $region18: #{_patch_embed_tokens.1} parent=11 // pred_check_branch
          %126 = sbr.rel (%p124) target = $region20
        $region19: #{_patch_embed_tokens.1} parent=11 // pred_region
          _
        $region20: #{_patch_embed_tokens.1} parent=11 // pred_fallthru
          _
      $region12: #{_patch_embed_tokens.1} parent=5 // pred_fallthru
        _
      %p127 = scmp.lt.s32.totalorder %s12, 2
      // Predicated region
      $region21: #{_patch_embed_tokens.1} parent=5 // pred_check
        %p128 = pneg %p127
      $region22: #{_patch_embed_tokens.1} parent=5 // pred_check_branch
        %130 = sbr.rel (%p128) target = $region24
      $region23: #{_patch_embed_tokens.1} parent=5 // pred_region
        // Predicated region
        $region25: #{_patch_embed_tokens.1} parent=23 // pred_check
          %p131 = pneg %p32
        $region26: #{_patch_embed_tokens.1} parent=23 // pred_check_branch
          %133 = sbr.rel (%p131) target = $region28
        $region27: #{_patch_embed_tokens.1} parent=23 // pred_region
          %s134 = smul.u32 2, %s12
          %p135 = scmp.lt.s32.totalorder %s134, 3
          %s136 = scalar_select %p135, %s134, 3
          %s137 = smul.addr %s136, 2
          %s138 = smul.addr %s137, 4
          %s139 = scalar_lea.vmem %s0, %s138
          %s140 = smul.u32 2, %s12
        $region28: #{_patch_embed_tokens.1} parent=23 // pred_fallthru
          _
      $region24: #{_patch_embed_tokens.1} parent=5 // pred_fallthru
        _
      %p141 = scmp.le.s32.totalorder 1, %s12
      %p142 = scmp.lt.s32.totalorder %s12, 3
      %p143 = pnand %p141, %p142
      %p144 = pneg %p143
      // Predicated region
      $region29: #{_patch_embed_tokens.1} parent=5 // pred_check
        _
      $region30: #{_patch_embed_tokens.1} parent=5 // pred_check_branch
        %146 = sbr.rel (%p143) target = $region32
      $region31: #{_patch_embed_tokens.1} parent=5 // pred_region
        %s147 = ssub.s32 %s12, 1
        %s148 = smul.u32 2, %s17
        %p149 = scmp.lt.s32.totalorder %s148, 3
        %s150 = scalar_select %p149, %s148, 3
        %s151 = smul.addr %s150, 2
        %s152 = smul.addr %s151, 4
        %s153 = scalar_lea.vmem %s0, %s152
        %p154 = pneg %p38
        %p155 = pneg %p35
        %p156 = pneg %p59
        %p157 = pneg %p56
        %p158 = pneg %p80
        %p159 = pneg %p77
        %p160 = pneg %p106
        %p161 = pneg %p103
        %s162 = sand.u32 %s93, 1
        %s163 = scalar_lea.sflag [#allocation3], %s162
        %s164 = sand.u32 %s93, 1
        %s165 = smul.addr %s164, 16
        %s166 = scalar_lea.vmem [#allocation2], %s165
        %s167 = smul.u32 2, %s17
        %p168 = scmp.lt.s32.totalorder %s167, 3
        %s169 = scalar_select %p168, %s167, 3
        %s170 = smul.addr %s169, 2
        %s171 = smul.addr %s170, 4
        %s172 = scalar_lea.vmem %s0, %s171
        %s173 = smul.u32 2, %s17
        %s174 = smul.u32 2, %s17
        %v176 = vld [vmem:[%s172] sm:$0xff]
        %v177 = vld [vmem:[%s172 + $0x8] sm:$0xff]
        %v178 = vld [vmem:[%s1] sm:$0xf]
        %v179 = vld [vmem:[%s1 + $0x4] sm:$0xf]
        %v180 = vld [vmem:[%s1 + $0x8] sm:$0xf]
        %v181 = vld [vmem:[%s1 + $0xc] sm:$0xf]
        %v182 = vld [vmem:[%s1 + $0x10] sm:$0xf]
        %v183 = vld [vmem:[%s1 + $0x14] sm:$0xf]
        %v184 = vld [vmem:[%s1 + $0x18] sm:$0xf]
        %v185 = vld [vmem:[%s1 + $0x1c] sm:$0xf]
        %v186 = vld [vmem:[%s1 + $0x20] sm:$0xf]
        %v187 = vld [vmem:[%s1 + $0x24] sm:$0xf]
        %v188 = vld [vmem:[%s1 + $0x28] sm:$0xf]
        %v189 = vld [vmem:[%s1 + $0x2c] sm:$0xf]
        %v190 = vld [vmem:[%s1 + $0x30] sm:$0xf]
        %v191 = vld [vmem:[%s1 + $0x34] sm:$0xf]
        %v192 = vld [vmem:[%s1 + $0x38] sm:$0xf]
        %v193 = vld [vmem:[%s1 + $0x3c] sm:$0xf]
        %v194 = vld [vmem:[%s1 + $0x40] sm:$0xf]
        %v195 = vld [vmem:[%s1 + $0x44] sm:$0xf]
        %v196 = vld [vmem:[%s1 + $0x48] sm:$0xf]
        %v197 = vld [vmem:[%s1 + $0x4c] sm:$0xf]
        %v198 = vld [vmem:[%s1 + $0x50] sm:$0xf]
        %v199 = vld [vmem:[%s1 + $0x54] sm:$0xf]
        %v200 = vld [vmem:[%s1 + $0x58] sm:$0xf]
        %v201 = vld [vmem:[%s1 + $0x5c] sm:$0xf]
        %v202 = vld [vmem:[%s1 + $0x60] sm:$0xf]
        %v203 = vld [vmem:[%s1 + $0x64] sm:$0xf]
        %v204 = vld [vmem:[%s1 + $0x68] sm:$0xf]
        %v205 = vld [vmem:[%s1 + $0x6c] sm:$0xf]
        %v206 = vld [vmem:[%s1 + $0x70] sm:$0xf]
        %v207 = vld [vmem:[%s1 + $0x74] sm:$0xf]
        %v208 = vld [vmem:[%s1 + $0x78] sm:$0xf]
        %v209 = vld [vmem:[%s1 + $0x7c] sm:$0xf]
        %v210 = vld [vmem:[%s2] sm:$0x1]
        %v212 = vlaneseq
        %v213 = vshrl.u32 %v212, 7
        %v214 = vsub.s32 0, %v213
        %v215 = vrot.slane %v210, %v214
        %v219 = vunpack.c.l.b16 %v176
        %v220 = vunpack.c.h.b16 %v176
        %v221 = vunpack.c.l.b16 %v177
        %v222 = vunpack.c.h.b16 %v177
        %v223 = vpack.c.b16 %v221, %v219
        %v224 = vpack.c.b16 %v222, %v220
        %v259 = vunpack.c.l.b16 %v178
        %v260 = vunpack.c.l.b16 %v179
        %v261 = vunpack.c.l.b16 %v180
        %v262 = vunpack.c.l.b16 %v181
        %v263 = vunpack.c.l.b16 %v182
        %v264 = vunpack.c.l.b16 %v183
        %v265 = vunpack.c.l.b16 %v184
        %v266 = vunpack.c.l.b16 %v185
        %v267 = vunpack.c.l.b16 %v186
        %v268 = vunpack.c.l.b16 %v187
        %v269 = vunpack.c.l.b16 %v188
        %v270 = vunpack.c.l.b16 %v189
        %v271 = vunpack.c.l.b16 %v190
        %v272 = vunpack.c.l.b16 %v191
        %v273 = vunpack.c.l.b16 %v192
        %v274 = vunpack.c.l.b16 %v193
        %v275 = vunpack.c.l.b16 %v194
        %v276 = vunpack.c.l.b16 %v195
        %v277 = vunpack.c.l.b16 %v196
        %v278 = vunpack.c.l.b16 %v197
        %v279 = vunpack.c.l.b16 %v198
        %v280 = vunpack.c.l.b16 %v199
        %v281 = vunpack.c.l.b16 %v200
        %v282 = vunpack.c.l.b16 %v201
        %v283 = vunpack.c.l.b16 %v202
        %v284 = vunpack.c.l.b16 %v203
        %v285 = vunpack.c.l.b16 %v204
        %v286 = vunpack.c.l.b16 %v205
        %v287 = vunpack.c.l.b16 %v206
        %v288 = vunpack.c.l.b16 %v207
        %v289 = vunpack.c.l.b16 %v208
        %v290 = vunpack.c.l.b16 %v209
        %v291 = vpack.c.b16 %v260, %v259
        %v292 = vpack.c.b16 %v262, %v261
        %v293 = vpack.c.b16 %v264, %v263
        %v294 = vpack.c.b16 %v266, %v265
        %v295 = vpack.c.b16 %v268, %v267
        %v296 = vpack.c.b16 %v270, %v269
        %v297 = vpack.c.b16 %v272, %v271
        %v298 = vpack.c.b16 %v274, %v273
        %v299 = vpack.c.b16 %v276, %v275
        %v300 = vpack.c.b16 %v278, %v277
        %v301 = vpack.c.b16 %v280, %v279
        %v302 = vpack.c.b16 %v282, %v281
        %v303 = vpack.c.b16 %v284, %v283
        %v304 = vpack.c.b16 %v286, %v285
        %v305 = vpack.c.b16 %v288, %v287
        %v306 = vpack.c.b16 %v290, %v289
        %323 = vmatprep.subr.bf16.mxu0 0
        %324 = vmatpush1.bf16.msra.mxu0 %v291
        %325 = vmatprep.subr.bf16.mxu0 0
        %326 = vmatpush1.bf16.msra.mxu0 %v292
        %327 = vmatprep.subr.bf16.mxu0 0
        %328 = vmatpush1.bf16.msra.mxu0 %v293
        %329 = vmatprep.subr.bf16.mxu0 0
        %330 = vmatpush1.bf16.msra.mxu0 %v294
        %331 = vmatprep.subr.bf16.mxu0 0
        %332 = vmatpush1.bf16.msra.mxu0 %v295
        %333 = vmatprep.subr.bf16.mxu0 0
        %334 = vmatpush1.bf16.msra.mxu0 %v296
        %335 = vmatprep.subr.bf16.mxu0 0
        %336 = vmatpush1.bf16.msra.mxu0 %v297
        %337 = vmatprep.subr.bf16.mxu0 0
        %338 = vmatpush1.bf16.msra.mxu0 %v298
        %339 = vmatprep.subr.bf16.mxu0 0
        %340 = vmatpush1.bf16.msra.mxu0 %v299
        %341 = vmatprep.subr.bf16.mxu0 0
        %342 = vmatpush1.bf16.msra.mxu0 %v300
        %343 = vmatprep.subr.bf16.mxu0 0
        %344 = vmatpush1.bf16.msra.mxu0 %v301
        %345 = vmatprep.subr.bf16.mxu0 0
        %346 = vmatpush1.bf16.msra.mxu0 %v302
        %347 = vmatprep.subr.bf16.mxu0 0
        %348 = vmatpush1.bf16.msra.mxu0 %v303
        %349 = vmatprep.subr.bf16.mxu0 0
        %350 = vmatpush1.bf16.msra.mxu0 %v304
        %351 = vmatprep.subr.bf16.mxu0 0
        %352 = vmatpush1.bf16.msra.mxu0 %v305
        %353 = vmatprep.subr.bf16.mxu0 0
        %354 = vmatpush1.bf16.msra.mxu0 %v306
        %355 = vmatprep.mubr.bf16.mxu0 %v224
        %356 = vmatmul.mubr.bf16.gmra.mrb[0].mxu0 %v223
        %v357 = vpop.f32.mrb[0].mxu0
        %v358 = vadd.f32 %v215, %v357
        %v359 = vpop.f32.mrb[0].mxu0
        %v360 = vpop.f32.mrb[0].mxu0
        %v361 = vadd.f32 %v215, %v360
        %v362 = vpop.f32.mrb[0].mxu0
        %363 = vdwg.mxu0
        %vm364 = vcmask 261120
        %365 = vst.msk [vmem:[%s166] sm:$0xff] %vm364, %v358
        %366 = vst.msk [vmem:[%s166 + $0x8] sm:$0xff] %vm364, %v361
        %s367 = sand.u32 %s93, 1
        %s368 = scalar_lea.sflag [#allocation3], %s367
        %s369 = sand.u32 %s93, 1
        %s370 = smul.addr %s369, 16
        %s371 = scalar_lea.vmem [#allocation2], %s370
        // Predicated region
        $region33: #{_patch_embed_tokens.1} parent=31 // pred_check
          %p372 = pneg %p103
        $region34: #{_patch_embed_tokens.1} parent=31 // pred_check_branch
          %374 = sbr.rel (%p372) target = $region36
        $region35: #{_patch_embed_tokens.1} parent=31 // pred_region
          %s375 = smul.u32 2, %s17
          %s377 = ssub.s32 256, 256
          %378 = vsyncadd %s368, %s377
          %s379 = smul.addr %s375, 128
          %s380 = scalar_lea.hbm %s3, %s379
          %s381 = sshll.u32 %s371, 4
          %s382 = int_to_ptr.vmem [resolvable:$true] %s381
          %387 = dma.vmem_to_hbm [thread:$0]  %s382, 256, %s380, %s368, 128, 128, 8
        $region36: #{_patch_embed_tokens.1} parent=31 // pred_fallthru
          _
      $region32: #{_patch_embed_tokens.1} parent=5 // pred_fallthru
        _
      %p388 = scmp.le.s32.totalorder 2, %s12
      // Predicated region
      $region37: #{_patch_embed_tokens.1} parent=5 // pred_check
        %p389 = pneg %p388
      $region38: #{_patch_embed_tokens.1} parent=5 // pred_check_branch
        %391 = sbr.rel (%p389) target = $region40
      $region39: #{_patch_embed_tokens.1} parent=5 // pred_region
        %s392 = ssub.s32 %s12, 2
        // Predicated region
        $region41: #{_patch_embed_tokens.1} parent=39 // pred_check
          %p393 = pneg %p109
        $region42: #{_patch_embed_tokens.1} parent=39 // pred_check_branch
          %395 = sbr.rel (%p393) target = $region44
        $region43: #{_patch_embed_tokens.1} parent=39 // pred_region
          %s396 = sand.u32 %s94, 1
          %s397 = scalar_lea.sflag [#allocation3], %s396
          %s398 = sand.u32 %s94, 1
          %s399 = smul.addr %s398, 16
          %s400 = scalar_lea.vmem [#allocation2], %s399
          %401 = dma.done %s397, 256
        $region44: #{_patch_embed_tokens.1} parent=39 // pred_fallthru
          _
      $region40: #{_patch_embed_tokens.1} parent=5 // pred_fallthru
        _
    $region6: #{_patch_embed_tokens.1} parent=1 // loop_footer
      %s16 = sadd.s32 1, %s12
    $region7: #{_patch_embed_tokens.1} parent=1 // loop_footer_branch
      %11 = sbr.rel target = $region3
    $region8: #{_patch_embed_tokens.1} parent=1 // loop_exit
      _
    %402 = vsyncpa [#allocation3], 1
    %s403 = scalar_lea.sflag [#allocation3], 1
    %404 = vsyncpa %s403, 1

</llo_original>
